<compile_context>
chip_gen: v7x
topology: tpu7x:2x2x1
jax: 0.10.0
libtpu: 0.0.40
codegen_flags: <defaults>
</compile_context>

<pallas_src>
import functools

import jax
import jax.numpy as jnp
import numpy as np
from jax import lax
from jax.experimental import pallas as pl
from jax.experimental.pallas import tpu as pltpu


_ROW_TARGET = 1024      # flattened output rows (th*wph) per grid step
_FUSE_K_MAX_CIN = 32    # below this, use the single fused-K matmul path


def _round_up(x, m):
    return (x + m - 1) // m * m


def _pick_tco(cout):
    """Output-channel tile: 256 on the 256-wide-MXU gens (v6e/v7x), else 128."""
    kind = ""
    try:
        kind = jax.devices()[0].device_kind.lower()
    except Exception:
        pass
    wide_mxu = any(t in kind for t in ("v6", "v7", "7x"))
    return 256 if (wide_mxu and cout > 128) else 128


def _vmem_limit(need_bytes):
    # Size the scoped-VMEM request from actual need (+ generous headroom for
    # (8,128) tile padding / compiler scratch) instead of hard-coding the
    # whole physical VMEM of a v7x TensorCore.
    return int(max(min(2 * need_bytes + (4 << 20), 48 << 20),
                   need_bytes + (2 << 20),
                   16 << 20))


# ----------------------------- Pallas kernels ------------------------------ #
def _fused_kernel(x_ref, w_ref, b_ref, o_ref):
    # x_ref: (L, K)   pre-gathered phase-conv patches (bf16), K = 16*Cin_pad
    # w_ref: (K, TCo) BN-folded weights (bf16)
    # b_ref: (1, TCo) folded conv+BN bias (f32)
    # o_ref: (L, TCo)
    acc = jnp.dot(x_ref[...], w_ref[...], preferred_element_type=jnp.float32)
    o_ref[...] = (acc + b_ref[...]).astype(o_ref.dtype)


def _tap_kernel(x_ref, w_ref, b_ref, o_ref, *, th, wph):
    # x_ref: (Hf, C4p)    whole space-to-depth image for this batch element
    #                     (bf16), resident in VMEM across the (co, oh) sweep.
    # w_ref: (4, C4p, TCo) the four 2x2 phase-conv taps, BN scale folded (bf16)
    # b_ref: (1, TCo)      folded conv+BN bias (f32)
    # o_ref: (L, TCo)      L = th*wph flattened output rows
    L = th * wph
    base = pl.multiple_of(pl.program_id(2) * L, 8)

    # dw = 0 taps are 8-aligned: feed the MXU straight from the ref
    # (no materialized slab value -> no VMEM<->vreg round trip per step).
    acc = jnp.dot(x_ref[pl.ds(base, L), :], w_ref[0],
                  preferred_element_type=jnp.float32)
    acc = acc + jnp.dot(x_ref[pl.ds(pl.multiple_of(base + wph, 8), L), :],
                        w_ref[2], preferred_element_type=jnp.float32)

    # dw = 1 taps are sublane-misaligned (start = base + 1).  Realign ONCE:
    # a single shifted (L + wph)-row block is loaded and re-used for BOTH dh
    # taps via 8-aligned sub-slices, instead of two independent misaligned
    # (L, C4p) realignments.
    shifted = x_ref[pl.ds(base + 1, L + wph), :]
    acc = acc + jnp.dot(shifted[:L, :], w_ref[1],
                        preferred_element_type=jnp.float32)
    acc = acc + jnp.dot(shifted[wph:wph + L, :], w_ref[3],
                        preferred_element_type=jnp.float32)

    o_ref[...] = (acc + b_ref[...]).astype(o_ref.dtype)


# --------------------------- pallas_call drivers --------------------------- #
def _run_fused(x_ig, w2k, bias, *, L, tco, out_dtype):
    n, rows, K = x_ig.shape
    co_pad = w2k.shape[1]
    grid = (n, co_pad // tco, rows // L)
    out_bytes = jnp.dtype(out_dtype).itemsize

    vmem_need = (2 * L * K * 2 + 2 * K * tco * 2
                 + 2 * L * tco * out_bytes + 2 * tco * 4)
    flops = 2 * n * rows * K * co_pad
    bytes_accessed = (x_ig.size * 2 + n * K * co_pad * 2
                      + n * rows * co_pad * out_bytes)

    return pl.pallas_call(
        _fused_kernel,
        out_shape=jax.ShapeDtypeStruct((n, rows, co_pad), out_dtype),
        grid_spec=pltpu.PrefetchScalarGridSpec(
            num_scalar_prefetch=0,
            grid=grid,
            in_specs=[
                pl.BlockSpec((None, L, K), lambda b, co, oh: (b, oh, 0)),
                pl.BlockSpec((K, tco), lambda b, co, oh: (0, co)),
                pl.BlockSpec((1, tco), lambda b, co, oh: (0, co)),
            ],
            out_specs=pl.BlockSpec((None, L, tco),
                                   lambda b, co, oh: (b, oh, co)),
        ),
        compiler_params=pltpu.CompilerParams(
            # No cross-step reduction; all axes parallel (v7x 2-TC sharding
            # can split any of them).
            dimension_semantics=("parallel", "parallel", "parallel"),
            vmem_limit_bytes=_vmem_limit(vmem_need),
        ),
        cost_estimate=pl.CostEstimate(flops=flops, transcendentals=0,
                                      bytes_accessed=bytes_accessed),
    )(x_ig, w2k, bias)


def _run_taps(xph, w2, bias, *, hout_pad, th, wph, tco, out_dtype):
    n, hf, c4p = xph.shape
    co_pad = w2.shape[2]
    L = th * wph
    grid = (n, co_pad // tco, hout_pad // th)
    out_bytes = jnp.dtype(out_dtype).itemsize

    x_block = hf * c4p * 2
    w_block = 4 * c4p * tco * 2
    o_block = L * tco * out_bytes
    # The phase image (and, for huge Cin, the weight tile) is resident across
    # the (co, oh) sweep; double-buffering it is pure VMEM waste.  Gate by
    # size so small shapes keep the default (known-good) pipeline.
    x_single = x_block > (4 << 20)
    w_single = w_block > (8 << 20)
    vmem_need = ((1 if x_single else 2) * x_block
                 + (1 if w_single else 2) * w_block
                 + 2 * o_block + 2 * tco * 4)

    def _spec(shape, index_map, single):
        if single:
            return pl.BlockSpec(shape, index_map, pipeline_mode=pl.Buffered(1))
        return pl.BlockSpec(shape, index_map)

    kernel = functools.partial(_tap_kernel, th=th, wph=wph)
    flops = 2 * n * hout_pad * wph * (4 * c4p) * co_pad
    bytes_accessed = (xph.size * 2 + n * 4 * c4p * co_pad * 2
                      + n * hout_pad * wph * co_pad * out_bytes)

    return pl.pallas_call(
        kernel,
        out_shape=jax.ShapeDtypeStruct((n, hout_pad * wph, co_pad), out_dtype),
        grid_spec=pltpu.PrefetchScalarGridSpec(
            num_scalar_prefetch=0,
            grid=grid,
            in_specs=[
                # whole phase image per batch element; block index constant
                # across (co, oh) -> DMA'd once per image.
                _spec((None, hf, c4p), lambda b, co, oh: (b, 0, 0), x_single),
                _spec((4, c4p, tco), lambda b, co, oh: (0, 0, co), w_single),
                pl.BlockSpec((1, tco), lambda b, co, oh: (0, co)),
            ],
            out_specs=pl.BlockSpec((None, L, tco),
                                   lambda b, co, oh: (b, oh, co)),
        ),
        compiler_params=pltpu.CompilerParams(
            dimension_semantics=("parallel", "parallel", "parallel"),
            vmem_limit_bytes=_vmem_limit(vmem_need),
        ),
        cost_estimate=pl.CostEstimate(flops=flops, transcendentals=0,
                                      bytes_accessed=bytes_accessed),
    )(xph, w2, bias)


# ------------------------------ Downsample --------------------------------- #
def downsample_forward(x, params, *, data_format="NCHW",
                       out_dtype=jnp.float32):
    """Conv2d(3x3, stride 2, pad 1) + inference BatchNorm.

    data_format: "NCHW" (PyTorch-compatible, default) or "NHWC" (skips the
    layout transposes - a full extra HBM pass each way).
    out_dtype: jnp.float32 (default, matches the module) or jnp.bfloat16 to
    halve output store / HBM-write traffic if downstream allows.
    """
    w = params["conv_w"]          # (Cout, Cin, 3, 3)
    b = params["conv_b"]          # (Cout,)
    gamma, beta = params["bn_gamma"], params["bn_beta"]
    mean, var, eps = params["bn_mean"], params["bn_var"], params["bn_eps"]

    if data_format == "NCHW":
        xh = jnp.transpose(x, (0, 2, 3, 1))
    elif data_format == "NHWC":
        xh = x
    else:
        raise ValueError(f"bad data_format: {data_format}")
    n, h, wd, cin = xh.shape
    cout = w.shape[0]
    hout = (h - 1) // 2 + 1
    wout = (wd - 1) // 2 + 1

    # ---- derived tiling (all padded; no divisibility asserts) ----
    tco = _pick_tco(cout)
    co_pad = _round_up(cout, tco)                  # lane-dense output channels
    wph = _round_up(wout + 1, 8)                   # phase-image width (+halo)
    th = max(1, min(hout, _ROW_TARGET // wph))     # output rows per grid step
    hout_pad = _round_up(hout, th)
    L = th * wph
    cin_pad = _round_up(cin, 2)                    # makes 4*cin_pad % 8 == 0
    c4p = 4 * cin_pad                              # phase-conv contraction dim
    fuse_k = cin < _FUSE_K_MAX_CIN

    # ---- input: ONE fused pad (spatial halo + channel), then s2d(2) ----
    # 3x3/stride-2 conv on the padded image == 2x2/stride-1 conv on the
    # space-to-depth image with 4*Cin channels (unused taps get zero weights).
    hp2, wp2 = 2 * (hout_pad + 2), 2 * wph
    xpad = jnp.pad(xh.astype(jnp.bfloat16),
                   ((0, 0), (1, hp2 - h - 1), (1, wp2 - wd - 1),
                    (0, cin_pad - cin)))
    xph = xpad.reshape(n, hout_pad + 2, 2, wph, 2, cin_pad)
    xph = xph.transpose(0, 1, 3, 2, 4, 5).reshape(n, (hout_pad + 2) * wph, c4p)

    # ---- weights: fold BN scale, scatter 3x3 taps into the 2x2 phase conv ----
    scale = gamma * lax.rsqrt(var + eps)                       # (Cout,)
    bias = ((b - mean) * scale + beta).astype(jnp.float32)     # (Cout,)
    w_s = w * scale[:, None, None, None]                       # (Cout,Cin,3,3)
    w2 = jnp.zeros((2, 2, 4, cin_pad, cout), jnp.float32)
    for kh in range(3):
        for kw in range(3):
            w2 = w2.at[kh // 2, kw // 2, 2 * (kh % 2) + (kw % 2),
                       :cin, :].set(jnp.transpose(w_s[:, :, kh, kw]))
    w2 = jnp.pad(w2.reshape(4, c4p, cout),
                 ((0, 0), (0, 0), (0, co_pad - cout))).astype(jnp.bfloat16)
    bias = jnp.pad(bias, (0, co_pad - cout)).reshape(1, co_pad)

    if fuse_k:
        # Small Cin: K = 4*c4p = 16*cin_pad under-feeds the MXU if split into
        # four dots.  Gather the 2x2 phase neighborhood into channels once in
        # the wrapper (cheap: input << output for small Cin) and run ONE
        # lane-dense matmul per step, fully BlockSpec-pipelined.
        rows = hout_pad * wph
        taps = [xph[:, dh * wph + dw: dh * wph + dw + rows, :]
                for dh in (0, 1) for dw in (0, 1)]
        x_ig = jnp.concatenate(taps, axis=2)                   # (n, rows, 4*c4p)
        out = _run_fused(x_ig, w2.reshape(4 * c4p, co_pad), bias,
                         L=L, tco=tco, out_dtype=out_dtype)
    else:
        # Large Cin: keep the phase image resident (~1x input HBM traffic) and
        # issue the four taps as separate MXU dots.
        out = _run_taps(xph, w2, bias, hout_pad=hout_pad, th=th, wph=wph,
                        tco=tco, out_dtype=out_dtype)

    out = out.reshape(n, hout_pad, wph, co_pad)[:, :hout, :wout, :cout]
    if data_format == "NCHW":
        out = jnp.transpose(out, (0, 3, 1, 2))
    return out


def init_params(key, in_dim, out_dim):
    k1, k2, k3, k4, k5, k6 = jax.random.split(key, 6)
    return {
        "conv_w": 0.05 * jax.random.normal(k1, (out_dim, in_dim, 3, 3),
                                           jnp.float32),
        "conv_b": 0.05 * jax.random.normal(k2, (out_dim,), jnp.float32),
        "bn_gamma": 1.0 + 0.1 * jax.random.normal(k3, (out_dim,), jnp.float32),
        "bn_beta": 0.1 * jax.random.normal(k4, (out_dim,), jnp.float32),
        "bn_mean": 0.1 * jax.random.normal(k5, (out_dim,), jnp.float32),
        "bn_var": jnp.abs(1.0 + 0.1 * jax.random.normal(k6, (out_dim,),
                                                        jnp.float32)),
        "bn_eps": jnp.float32(1e-5),
    }


def _reference(x, params):
    """Pure-JAX (XLA, f32) reference: conv + inference BN."""
    conv = lax.conv_general_dilated(
        x, params["conv_w"], window_strides=(2, 2), padding=((1, 1), (1, 1)),
        dimension_numbers=("NCHW", "OIHW", "NCHW"))
    conv = conv + params["conv_b"][None, :, None, None]
    scale = params["bn_gamma"] / jnp.sqrt(params["bn_var"] + params["bn_eps"])
    bias = params["bn_beta"] - params["bn_mean"] * scale
    return conv * scale[None, :, None, None] + bias[None, :, None, None]


if __name__ == "__main__":
    key = jax.random.PRNGKey(0)

    # --- test 1: small Cin -> fused single-matmul path (the module's typical
    #     stem-downsample regime) ---
    kx, kp, key = jax.random.split(key, 3)
    N, Cin, H, W, Cout = 2, 4, 16, 16, 64
    x = jax.random.normal(kx, (N, Cin, H, W), jnp.float32)
    params = init_params(kp, Cin, Cout)

    out = jax.block_until_ready(jax.jit(downsample_forward)(x, params))
    ref = jax.block_until_ready(_reference(x, params))
    assert out.shape == (N, Cout, H // 2, W // 2), out.shape
    np.testing.assert_allclose(np.asarray(out), np.asarray(ref),
                               rtol=2e-2, atol=2e-2)

    # --- test 2: Cin >= 32 -> resident phase-image / 4-tap kernel path ---
    kx2, kp2 = jax.random.split(key)
    N2, Cin2, H2, W2, Cout2 = 1, 48, 8, 8, 256
    x2 = jax.random.normal(kx2, (N2, Cin2, H2, W2), jnp.float32)
    params2 = init_params(kp2, Cin2, Cout2)

    out2 = jax.block_until_ready(jax.jit(downsample_forward)(x2, params2))
    ref2 = jax.block_until_ready(_reference(x2, params2))
    assert out2.shape == (N2, Cout2, H2 // 2, W2 // 2), out2.shape
    np.testing.assert_allclose(np.asarray(out2), np.asarray(ref2),
                               rtol=3e-2, atol=3e-2)

    print("KERNEL_OK")
</pallas_src>

<mosaic_0001>
module attributes {stable_mosaic.version = 11 : i64} {
  func.func @_fused_kernel(%arg0: i32, %arg1: i32, %arg2: i32, %arg3: memref<1x128x64xbf16, #tpu.memory_space<vmem>>, %arg4: memref<64x128xbf16, #tpu.memory_space<vmem>>, %arg5: memref<1x128xf32, #tpu.memory_space<vmem>>, %arg6: memref<1x128x128xf32, #tpu.memory_space<vmem>>) attributes {dimension_semantics = [#tpu.dimension_semantics<parallel>, #tpu.dimension_semantics<parallel>, #tpu.dimension_semantics<parallel>], iteration_bounds = array<i64: 2, 1, 1>, scalar_prefetch = 0 : i64, scratch_operands = 0 : i64, tpu.core_type = #tpu.core_type<tc>, window_params = [{transform_indices = @transform_0, window_bounds = array<i64: 1, 128, 64>}, {transform_indices = @transform_1, window_bounds = array<i64: 64, 128>}, {transform_indices = @transform_2, window_bounds = array<i64: 1, 128>}, {transform_indices = @transform_3, window_bounds = array<i64: 1, 128, 128>}]} {
    %c0 = arith.constant 0 : index
    %c0_0 = arith.constant 0 : index
    %c0_1 = arith.constant 0 : index
    %0 = vector.load %arg3[%c0, %c0_0, %c0_1] : memref<1x128x64xbf16, #tpu.memory_space<vmem>>, vector<1x128x64xbf16>
    %1 = vector.shape_cast %0 : vector<1x128x64xbf16> to vector<128x64xbf16>
    %c0_2 = arith.constant 0 : index
    %c0_3 = arith.constant 0 : index
    %2 = vector.load %arg4[%c0_2, %c0_3] : memref<64x128xbf16, #tpu.memory_space<vmem>>, vector<64x128xbf16>
    %cst = arith.constant dense<0.000000e+00> : vector<128x128xf32>
    %3 = tpu.matmul %1, %2, %cst {dimension_numbers = #tpu.dot_dimension_numbers<[1], [0], [0], [1], [0, 0, 1, 1], [], []>} : vector<128x64xbf16>, vector<64x128xbf16>, vector<128x128xf32> -> vector<128x128xf32>
    %c0_4 = arith.constant 0 : index
    %c0_5 = arith.constant 0 : index
    %4 = vector.load %arg5[%c0_4, %c0_5] : memref<1x128xf32, #tpu.memory_space<vmem>>, vector<1x128xf32>
    %5 = vector.broadcast %4 : vector<1x128xf32> to vector<128x128xf32>
    %6 = arith.addf %3, %5 : vector<128x128xf32>
    %c0_6 = arith.constant 0 : index
    %c0_7 = arith.constant 0 : index
    %c0_8 = arith.constant 0 : index
    %7 = vector.load %arg6[%c0_6, %c0_7, %c0_8] : memref<1x128x128xf32, #tpu.memory_space<vmem>>, vector<1x128x128xf32>
    %8 = vector.shape_cast %7 : vector<1x128x128xf32> to vector<128x128xf32>
    %9 = vector.shape_cast %6 : vector<128x128xf32> to vector<1x128x128xf32>
    tpu.vector_store %arg6[%c0_6, %c0_7, %c0_8], %9 {strides = array<i32>} : memref<1x128x128xf32, #tpu.memory_space<vmem>>, vector<1x128x128xf32>,
    return
  }
  func.func @transform_0(%arg0: i32, %arg1: i32, %arg2: i32) -> (i32, i32, i32) {
    %c0_i32 = arith.constant 0 : i32
    %c0_i32_0 = arith.constant 0 : i32
    return %arg0, %arg2, %c0_i32 : i32, i32, i32
  }
  func.func @transform_1(%arg0: i32, %arg1: i32, %arg2: i32) -> (i32, i32) {
    %c0_i32 = arith.constant 0 : i32
    %c0_i32_0 = arith.constant 0 : i32
    return %c0_i32, %arg1 : i32, i32
  }
  func.func @transform_2(%arg0: i32, %arg1: i32, %arg2: i32) -> (i32, i32) {
    %c0_i32 = arith.constant 0 : i32
    %c0_i32_0 = arith.constant 0 : i32
    return %c0_i32, %arg1 : i32, i32
  }
  func.func @transform_3(%arg0: i32, %arg1: i32, %arg2: i32) -> (i32, i32, i32) {
    %c0_i32 = arith.constant 0 : i32
    return %arg0, %arg2, %arg1 : i32, i32, i32
  }
}

</mosaic_0001>

<llo_original>
// kernel: downsample_forward.1
$region0: #{downsample_forward.1}
  #allocation0 [shape = 'u32[]', space=smem, size = 0x4, offset = 0x4, fixed_abs, tag = 'smem constant byte address 0x4 - core index']
  #allocation1 [shape = 'u32[144,128]{1,0:T(1,128)}', space=vmem, size = 0x12000, scoped, tag = 'internal scratch']
  %s0 = inlined_call_operand.vmem [shape: bf16[2,128,64], index: 0, kind: input, shape index: {}]
  %s1 = inlined_call_operand.vmem [shape: bf16[64,128], index: 1, kind: input, shape index: {}]
  %s2 = inlined_call_operand.vmem [shape: f32[1,128], index: 2, kind: input, shape index: {}]
  %s3 = inlined_call_operand.vmem [shape: f32[2,128,128], index: 3, kind: output, shape index: {}]
  %s4 = sld [smem:[#allocation0]]
  $region45: #{downsample_forward.1} parent=0
    _
  %s6 = ssub.s32 1, %s4
  %s7 = scalar_select 0, %s6, %s4
  loop: start=0, step=1, limit=4
  $region2: #{downsample_forward.1} parent=0 // loop_pre_header
    _
  $region3: #{downsample_forward.1} parent=0 // loop_header
    %s9 = sphi 0, %s13
    %p10 = scmp.ge.s32.totalorder %s9, 4
    %s16 = sphi 0, %s35
    %s17 = sphi 0, %s31
    %s18 = sphi 0, %s27
    %s19 = sphi 0, %s16
    %s20 = sphi 0, %s17
    %s21 = sphi 0, %s18
    %s22 = sphi 0, %s19
    %s23 = sphi 0, %s20
    %s24 = sphi 0, %s21
    %s40 = sphi 0, %s42
    %s43 = sphi 0, %s40
    %s44 = sphi 0, %s43
    %s60 = sphi 0, %s44
    %s66 = sphi 0, %s68
    %s69 = sphi 0, %s66
    %s70 = sphi 0, %s69
    %s86 = sphi 0, %s70
    %s92 = sphi 0, %s94
    %s95 = sphi 0, %s92
    %s96 = sphi 0, %s95
    %s112 = sphi 0, %s96
    %s122 = sphi 0, %s124
    %s125 = sphi 0, %s122
    %s126 = sphi 0, %s125
    %s142 = sphi 0, %s126
  $region4: #{downsample_forward.1} parent=0 // loop_header_branch
    %12 = sbr.rel (%p10) target = $region8
  $region5: #{downsample_forward.1} parent=0 // loop_body
    %s14 = ssub.s32 %s9, 1
    %s15 = ssub.s32 %s9, 2
    %s25 = sadd.s32 1, %s18
    %p26 = scmp.ge.s32.totalorder %s25, 1
    %s27 = scalar_select %p26, 0, %s25
    %s28 = sadd.s32 1, %s17
    %s29 = scalar_select %p26, %s28, %s17
    %p30 = scmp.ge.s32.totalorder %s29, 1
    %s31 = scalar_select %p30, 0, %s29
    %s32 = sadd.s32 1, %s16
    %s33 = scalar_select %p30, %s32, %s16
    %p34 = scmp.ge.s32.totalorder %s33, 2
    %s35 = scalar_select %p34, 0, %s33
    %s36 = ssub.s32 %s16, %s35
    %s37 = ssub.s32 %s18, %s27
    %s38 = sor.u32 %s36, %s37
    %p39 = scmp.eq.s32.totalorder %s38, 0
    %s41 = sadd.s32 %s40, 1
    %s42 = scalar_select %p39, %s40, %s41
    %p45 = pneg %p39
    %p46 = scmp.eq.s32.totalorder %s9, 1
    %p47 = por %p45, %p46
    %p48 = scmp.ne.s32.totalorder %s40, %s43
    %p49 = scmp.eq.s32.totalorder %s9, 0
    %p50 = por %p48, %p49
    %p51 = scmp.ne.s32.totalorder %s40, %s43
    %p52 = scmp.eq.s32.totalorder %s14, 1
    %p53 = por %p51, %p52
    %p54 = scmp.ne.s32.totalorder %s43, %s44
    %p55 = scmp.eq.s32.totalorder %s14, 0
    %p56 = por %p54, %p55
    %p57 = scmp.ne.s32.totalorder %s43, %s44
    %p58 = scmp.eq.s32.totalorder %s15, 1
    %p59 = por %p57, %p58
    %p61 = scmp.ne.s32.totalorder %s44, %s60
    %p62 = scmp.eq.s32.totalorder %s15, 0
    %p63 = por %p61, %p62
    %s64 = ssub.s32 %s17, %s31
    %p65 = scmp.eq.s32.totalorder %s64, 0
    %s67 = sadd.s32 %s66, 1
    %s68 = scalar_select %p65, %s66, %s67
    %p71 = pneg %p65
    %p72 = scmp.eq.s32.totalorder %s9, 1
    %p73 = por %p71, %p72
    %p74 = scmp.ne.s32.totalorder %s66, %s69
    %p75 = scmp.eq.s32.totalorder %s9, 0
    %p76 = por %p74, %p75
    %p77 = scmp.ne.s32.totalorder %s66, %s69
    %p78 = scmp.eq.s32.totalorder %s14, 1
    %p79 = por %p77, %p78
    %p80 = scmp.ne.s32.totalorder %s69, %s70
    %p81 = scmp.eq.s32.totalorder %s14, 0
    %p82 = por %p80, %p81
    %p83 = scmp.ne.s32.totalorder %s69, %s70
    %p84 = scmp.eq.s32.totalorder %s15, 1
    %p85 = por %p83, %p84
    %p87 = scmp.ne.s32.totalorder %s70, %s86
    %p88 = scmp.eq.s32.totalorder %s15, 0
    %p89 = por %p87, %p88
    %s90 = ssub.s32 %s17, %s31
    %p91 = scmp.eq.s32.totalorder %s90, 0
    %s93 = sadd.s32 %s92, 1
    %s94 = scalar_select %p91, %s92, %s93
    %p97 = pneg %p91
    %p98 = scmp.eq.s32.totalorder %s9, 1
    %p99 = por %p97, %p98
    %p100 = scmp.ne.s32.totalorder %s92, %s95
    %p101 = scmp.eq.s32.totalorder %s9, 0
    %p102 = por %p100, %p101
    %p103 = scmp.ne.s32.totalorder %s92, %s95
    %p104 = scmp.eq.s32.totalorder %s14, 1
    %p105 = por %p103, %p104
    %p106 = scmp.ne.s32.totalorder %s95, %s96
    %p107 = scmp.eq.s32.totalorder %s14, 0
    %p108 = por %p106, %p107
    %p109 = scmp.ne.s32.totalorder %s95, %s96
    %p110 = scmp.eq.s32.totalorder %s15, 1
    %p111 = por %p109, %p110
    %p113 = scmp.ne.s32.totalorder %s96, %s112
    %p114 = scmp.eq.s32.totalorder %s15, 0
    %p115 = por %p113, %p114
    %s116 = ssub.s32 %s16, %s35
    %s117 = ssub.s32 %s18, %s27
    %s118 = sor.u32 %s116, %s117
    %s119 = ssub.s32 %s17, %s31
    %s120 = sor.u32 %s118, %s119
    %p121 = scmp.eq.s32.totalorder %s120, 0
    %s123 = sadd.s32 %s122, 1
    %s124 = scalar_select %p121, %s122, %s123
    %p127 = pneg %p121
    %p128 = scmp.eq.s32.totalorder %s9, 1
    %p129 = por %p127, %p128
    %p130 = scmp.ne.s32.totalorder %s122, %s125
    %p131 = scmp.eq.s32.totalorder %s9, 0
    %p132 = por %p130, %p131
    %p133 = scmp.ne.s32.totalorder %s122, %s125
    %p134 = scmp.eq.s32.totalorder %s14, 1
    %p135 = por %p133, %p134
    %p136 = scmp.ne.s32.totalorder %s125, %s126
    %p137 = scmp.eq.s32.totalorder %s14, 0
    %p138 = por %p136, %p137
    %p139 = scmp.ne.s32.totalorder %s125, %s126
    %p140 = scmp.eq.s32.totalorder %s15, 1
    %p141 = por %p139, %p140
    %p143 = scmp.ne.s32.totalorder %s126, %s142
    %p144 = scmp.eq.s32.totalorder %s15, 0
    %p145 = por %p143, %p144
    %p146 = scmp.le.s32.totalorder 1, %s9
    %p147 = scmp.lt.s32.totalorder %s9, 3
    %p148 = pnand %p146, %p147
    %p149 = pneg %p148
    // Predicated region
    $region9: #{downsample_forward.1} parent=5 // pred_check
      _
    $region10: #{downsample_forward.1} parent=5 // pred_check_branch
      %151 = sbr.rel (%p148) target = $region12
    $region11: #{downsample_forward.1} parent=5 // pred_region
      %s152 = ssub.s32 %s9, 1
      // Predicated region
      $region13: #{downsample_forward.1} parent=11 // pred_check
        %p153 = pneg %p82
      $region14: #{downsample_forward.1} parent=11 // pred_check_branch
        %155 = sbr.rel (%p153) target = $region16
      $region15: #{downsample_forward.1} parent=11 // pred_region
        %p156 = scmp.lt.s32.totalorder %s20, 0
        %s157 = scalar_select %p156, %s20, 0
        %s158 = smul.addr %s157, 4
        %s159 = scalar_lea.vmem %s1, %s158
      $region16: #{downsample_forward.1} parent=11 // pred_fallthru
        _
      // Predicated region
      $region17: #{downsample_forward.1} parent=11 // pred_check
        %p160 = pneg %p108
      $region18: #{downsample_forward.1} parent=11 // pred_check_branch
        %162 = sbr.rel (%p160) target = $region20
      $region19: #{downsample_forward.1} parent=11 // pred_region
        %p163 = scmp.lt.s32.totalorder %s20, 0
        %s164 = scalar_select %p163, %s20, 0
        %s165 = scalar_lea.vmem %s2, %s164
      $region20: #{downsample_forward.1} parent=11 // pred_fallthru
        _
    $region12: #{downsample_forward.1} parent=5 // pred_fallthru
      _
    %p166 = scmp.lt.s32.totalorder %s9, 2
    // Predicated region
    $region21: #{downsample_forward.1} parent=5 // pred_check
      %p167 = pneg %p166
    $region22: #{downsample_forward.1} parent=5 // pred_check_branch
      %169 = sbr.rel (%p167) target = $region24
    $region23: #{downsample_forward.1} parent=5 // pred_region
      // Predicated region
      $region25: #{downsample_forward.1} parent=23 // pred_check
        %p170 = pneg %p50
      $region26: #{downsample_forward.1} parent=23 // pred_check_branch
        %172 = sbr.rel (%p170) target = $region28
      $region27: #{downsample_forward.1} parent=23 // pred_region
        %s173 = smul.u32 16, %s18
        %p174 = scmp.lt.s32.totalorder %s16, 1
        %s175 = scalar_select %p174, %s16, 1
        %p176 = scmp.lt.s32.totalorder %s173, 15
        %s177 = scalar_select %p176, %s173, 15
        %s178 = smul.addr %s175, 16
        %s179 = sadd.s32 %s177, %s178
        %s180 = smul.addr %s179, 4
        %s181 = scalar_lea.vmem %s0, %s180
        %s182 = smul.u32 16, %s18
      $region28: #{downsample_forward.1} parent=23 // pred_fallthru
        _
    $region24: #{downsample_forward.1} parent=5 // pred_fallthru
      _
    %p183 = scmp.le.s32.totalorder 1, %s9
    %p184 = scmp.lt.s32.totalorder %s9, 3
    %p185 = pnand %p183, %p184
    %p186 = pneg %p185
    // Predicated region
    $region29: #{downsample_forward.1} parent=5 // pred_check
      _
    $region30: #{downsample_forward.1} parent=5 // pred_check_branch
      %188 = sbr.rel (%p185) target = $region32
    $region31: #{downsample_forward.1} parent=5 // pred_region
      %s189 = ssub.s32 %s9, 1
      %s190 = smul.u32 16, %s21
      %p191 = scmp.lt.s32.totalorder %s19, 1
      %s192 = scalar_select %p191, %s19, 1
      %p193 = scmp.lt.s32.totalorder %s190, 15
      %s194 = scalar_select %p193, %s190, 15
      %s195 = smul.addr %s192, 16
      %s196 = sadd.s32 %s194, %s195
      %s197 = smul.addr %s196, 4
      %s198 = scalar_lea.vmem %s0, %s197
      %p199 = pneg %p56
      %p200 = pneg %p53
      %p201 = scmp.lt.s32.totalorder %s20, 0
      %s202 = scalar_select %p201, %s20, 0
      %s203 = smul.addr %s202, 4
      %s204 = scalar_lea.vmem %s1, %s203
      %p205 = pneg %p82
      %p206 = pneg %p79
      %p207 = scmp.lt.s32.totalorder %s20, 0
      %s208 = scalar_select %p207, %s20, 0
      %s209 = scalar_lea.vmem %s2, %s208
      %p210 = pneg %p108
      %p211 = pneg %p105
      %p212 = pneg %p138
      %p213 = pneg %p135
      %s214 = smul.u32 16, %s21
      %p215 = scmp.lt.s32.totalorder %s19, 1
      %s216 = scalar_select %p215, %s19, 1
      %p217 = scmp.lt.s32.totalorder %s214, 15
      %s218 = scalar_select %p217, %s214, 15
      %p219 = scmp.lt.s32.totalorder %s20, 0
      %s220 = scalar_select %p219, %s20, 0
      %s221 = sadd.s32 %s220, %s218
      %s222 = smul.addr %s216, 16
      %s223 = sadd.s32 %s221, %s222
      %s224 = smul.addr %s223, 8
      %s225 = scalar_lea.vmem %s3, %s224
      %s226 = smul.u32 16, %s21
      %p227 = scmp.lt.s32.totalorder %s19, 1
      %s228 = scalar_select %p227, %s19, 1
      %p229 = scmp.lt.s32.totalorder %s226, 15
      %s230 = scalar_select %p229, %s226, 15
      %s231 = smul.addr %s228, 16
      %s232 = sadd.s32 %s230, %s231
      %s233 = smul.addr %s232, 4
      %s234 = scalar_lea.vmem %s0, %s233
      %s235 = smul.u32 16, %s21
      %p236 = scmp.lt.s32.totalorder %s20, 0
      %s237 = scalar_select %p236, %s20, 0
      %s238 = smul.addr %s237, 4
      %s239 = scalar_lea.vmem %s1, %s238
      %p240 = scmp.lt.s32.totalorder %s20, 0
      %s241 = scalar_select %p240, %s20, 0
      %s242 = scalar_lea.vmem %s2, %s241
      %s243 = smul.u32 16, %s21
      %p244 = scmp.lt.s32.totalorder %s19, 1
      %s245 = scalar_select %p244, %s19, 1
      %p246 = scmp.lt.s32.totalorder %s243, 15
      %s247 = scalar_select %p246, %s243, 15
      %p248 = scmp.lt.s32.totalorder %s20, 0
      %s249 = scalar_select %p248, %s20, 0
      %s250 = sadd.s32 %s249, %s247
      %s251 = smul.addr %s245, 16
      %s252 = sadd.s32 %s250, %s251
      %s253 = smul.addr %s252, 8
      %s254 = scalar_lea.vmem %s3, %s253
      %s255 = smul.u32 16, %s21
      %v257 = vld [vmem:[%s234] sm:$0xf]
      %v258 = vld [vmem:[%s234 + $0x4] sm:$0xf]
      %v259 = vld [vmem:[%s234 + $0x8] sm:$0xf]
      %v260 = vld [vmem:[%s234 + $0xc] sm:$0xf]
      %v261 = vld [vmem:[%s234 + $0x10] sm:$0xf]
      %v262 = vld [vmem:[%s234 + $0x14] sm:$0xf]
      %v263 = vld [vmem:[%s234 + $0x18] sm:$0xf]
      %v264 = vld [vmem:[%s234 + $0x1c] sm:$0xf]
      %v265 = vld [vmem:[%s234 + $0x20] sm:$0xf]
      %v266 = vld [vmem:[%s234 + $0x24] sm:$0xf]
      %v267 = vld [vmem:[%s234 + $0x28] sm:$0xf]
      %v268 = vld [vmem:[%s234 + $0x2c] sm:$0xf]
      %v269 = vld [vmem:[%s234 + $0x30] sm:$0xf]
      %v270 = vld [vmem:[%s234 + $0x34] sm:$0xf]
      %v271 = vld [vmem:[%s234 + $0x38] sm:$0xf]
      %v272 = vld [vmem:[%s234 + $0x3c] sm:$0xf]
      %v273 = vld [vmem:[%s239] sm:$0xf]
      %v274 = vld [vmem:[%s239 + $0x4] sm:$0xf]
      %v275 = vld [vmem:[%s239 + $0x8] sm:$0xf]
      %v276 = vld [vmem:[%s239 + $0xc] sm:$0xf]
      %v277 = vld [vmem:[%s239 + $0x10] sm:$0xf]
      %v278 = vld [vmem:[%s239 + $0x14] sm:$0xf]
      %v279 = vld [vmem:[%s239 + $0x18] sm:$0xf]
      %v280 = vld [vmem:[%s239 + $0x1c] sm:$0xf]
      %v281 = vld [vmem:[%s242] sm:$0x1]
      %v283 = vlaneseq
      %v284 = vshrl.u32 %v283, 7
      %v285 = vsub.s32 0, %v284
      %v286 = vrot.slane %v281, %v285
      %v304 = vunpack.c.l.b16 %v257
      %v305 = vunpack.c.l.b16 %v258
      %v306 = vunpack.c.l.b16 %v259
      %v307 = vunpack.c.l.b16 %v260
      %v308 = vunpack.c.l.b16 %v261
      %v309 = vunpack.c.l.b16 %v262
      %v310 = vunpack.c.l.b16 %v263
      %v311 = vunpack.c.l.b16 %v264
      %v312 = vunpack.c.l.b16 %v265
      %v313 = vunpack.c.l.b16 %v266
      %v314 = vunpack.c.l.b16 %v267
      %v315 = vunpack.c.l.b16 %v268
      %v316 = vunpack.c.l.b16 %v269
      %v317 = vunpack.c.l.b16 %v270
      %v318 = vunpack.c.l.b16 %v271
      %v319 = vunpack.c.l.b16 %v272
      %v320 = vpack.c.b16 %v305, %v304
      %v321 = vpack.c.b16 %v307, %v306
      %v322 = vpack.c.b16 %v309, %v308
      %v323 = vpack.c.b16 %v311, %v310
      %v324 = vpack.c.b16 %v313, %v312
      %v325 = vpack.c.b16 %v315, %v314
      %v326 = vpack.c.b16 %v317, %v316
      %v327 = vpack.c.b16 %v319, %v318
      %v336 = vunpack.c.l.b16 %v273
      %v337 = vunpack.c.l.b16 %v274
      %v338 = vunpack.c.l.b16 %v275
      %v339 = vunpack.c.l.b16 %v276
      %v340 = vunpack.c.l.b16 %v277
      %v341 = vunpack.c.l.b16 %v278
      %v342 = vunpack.c.l.b16 %v279
      %v343 = vunpack.c.l.b16 %v280
      %v344 = vpack.c.b16 %v337, %v336
      %v345 = vpack.c.b16 %v339, %v338
      %v346 = vpack.c.b16 %v341, %v340
      %v347 = vpack.c.b16 %v343, %v342
      %vm352 = vcmask 523264
      %v354 = vsel %vm352, %v320, 0
      %v357 = vsel %vm352, %v321, 0
      %v360 = vsel %vm352, %v322, 0
      %v363 = vsel %vm352, %v323, 0
      %v366 = vsel %vm352, %v324, 0
      %v369 = vsel %vm352, %v325, 0
      %v372 = vsel %vm352, %v326, 0
      %v375 = vsel %vm352, %v327, 0
      %377 = vmatprep.subr.bf16.mxu0 0
      %378 = vmatpush1.bf16.msra.mxu0 %v344
      %379 = vmatprep.subr.bf16.mxu0 0
      %380 = vmatpush1.bf16.msra.mxu0 %v345
      %381 = vmatprep.subr.bf16.mxu0 0
      %382 = vmatpush1.bf16.msra.mxu0 %v346
      %383 = vmatprep.subr.bf16.mxu0 0
      %384 = vmatpush1.bf16.msra.mxu0 %v347
      %385 = vmatprep.subr.bf16.mxu0 0
      %386 = vmatpush1.bf16.msra.mxu0 0
      %387 = vmatprep.subr.bf16.mxu0 0
      %388 = vmatpush1.bf16.msra.mxu0 0
      %389 = vmatprep.subr.bf16.mxu0 0
      %390 = vmatpush1.bf16.msra.mxu0 0
      %391 = vmatprep.subr.bf16.mxu0 0
      %392 = vmatpush1.bf16.msra.mxu0 0
      %393 = vmatprep.subr.bf16.mxu0 0
      %394 = vmatpush1.bf16.msra.mxu0 0
      %395 = vmatprep.subr.bf16.mxu0 0
      %396 = vmatpush1.bf16.msra.mxu0 0
      %397 = vmatprep.subr.bf16.mxu0 0
      %398 = vmatpush1.bf16.msra.mxu0 0
      %399 = vmatprep.subr.bf16.mxu0 0
      %400 = vmatpush1.bf16.msra.mxu0 0
      %401 = vmatprep.subr.bf16.mxu0 0
      %402 = vmatpush1.bf16.msra.mxu0 0
      %403 = vmatprep.subr.bf16.mxu0 0
      %404 = vmatpush1.bf16.msra.mxu0 0
      %405 = vmatprep.subr.bf16.mxu0 0
      %406 = vmatpush1.bf16.msra.mxu0 0
      %407 = vmatprep.subr.bf16.mxu0 0
      %408 = vmatpush1.bf16.msra.mxu0 0
      %409 = vmatprep.mubr.bf16.mxu0 0
      %410 = vmatmul.mubr.bf16.gmra.mrb[0].mxu0 %v354
      %v411 = vpop.f32.mrb[0].mxu0
      %v412 = vadd.f32 %v286, %v411
      %v413 = vpop.f32.mrb[0].mxu0
      %v414 = vpop.f32.mrb[0].mxu0
      %v415 = vadd.f32 %v286, %v414
      %v416 = vpop.f32.mrb[0].mxu0
      %417 = vmatprep.mubr.bf16.mxu0 0
      %418 = vmatmul.mubr.bf16.gmra.mrb[0].mxu0 %v357
      %v419 = vpop.f32.mrb[0].mxu0
      %v420 = vadd.f32 %v286, %v419
      %v421 = vpop.f32.mrb[0].mxu0
      %v422 = vpop.f32.mrb[0].mxu0
      %v423 = vadd.f32 %v286, %v422
      %v424 = vpop.f32.mrb[0].mxu0
      %425 = vmatprep.mubr.bf16.mxu0 0
      %426 = vmatmul.mubr.bf16.gmra.mrb[0].mxu0 %v360
      %v427 = vpop.f32.mrb[0].mxu0
      %v428 = vadd.f32 %v286, %v427
      %v429 = vpop.f32.mrb[0].mxu0
      %v430 = vpop.f32.mrb[0].mxu0
      %v431 = vadd.f32 %v286, %v430
      %v432 = vpop.f32.mrb[0].mxu0
      %433 = vmatprep.mubr.bf16.mxu0 0
      %434 = vmatmul.mubr.bf16.gmra.mrb[0].mxu0 %v363
      %v435 = vpop.f32.mrb[0].mxu0
      %v436 = vadd.f32 %v286, %v435
      %v437 = vpop.f32.mrb[0].mxu0
      %v438 = vpop.f32.mrb[0].mxu0
      %v439 = vadd.f32 %v286, %v438
      %v440 = vpop.f32.mrb[0].mxu0
      %441 = vmatprep.mubr.bf16.mxu0 0
      %442 = vmatmul.mubr.bf16.gmra.mrb[0].mxu0 %v366
      %v443 = vpop.f32.mrb[0].mxu0
      %v444 = vadd.f32 %v286, %v443
      %v445 = vpop.f32.mrb[0].mxu0
      %v446 = vpop.f32.mrb[0].mxu0
      %v447 = vadd.f32 %v286, %v446
      %v448 = vpop.f32.mrb[0].mxu0
      %449 = vmatprep.mubr.bf16.mxu0 0
      %450 = vmatmul.mubr.bf16.gmra.mrb[0].mxu0 %v369
      %v451 = vpop.f32.mrb[0].mxu0
      %v452 = vadd.f32 %v286, %v451
      %v453 = vpop.f32.mrb[0].mxu0
      %v454 = vpop.f32.mrb[0].mxu0
      %v455 = vadd.f32 %v286, %v454
      %v456 = vpop.f32.mrb[0].mxu0
      %457 = vmatprep.mubr.bf16.mxu0 0
      %458 = vmatmul.mubr.bf16.gmra.mrb[0].mxu0 %v372
      %v459 = vpop.f32.mrb[0].mxu0
      %v460 = vadd.f32 %v286, %v459
      %v461 = vpop.f32.mrb[0].mxu0
      %v462 = vpop.f32.mrb[0].mxu0
      %v463 = vadd.f32 %v286, %v462
      %v464 = vpop.f32.mrb[0].mxu0
      %465 = vmatprep.mubr.bf16.mxu0 0
      %466 = vmatmul.mubr.bf16.gmra.mrb[0].mxu0 %v375
      %v467 = vpop.f32.mrb[0].mxu0
      %v468 = vadd.f32 %v286, %v467
      %v469 = vpop.f32.mrb[0].mxu0
      %v470 = vpop.f32.mrb[0].mxu0
      %v471 = vadd.f32 %v286, %v470
      %v472 = vpop.f32.mrb[0].mxu0
      %473 = vdwg.mxu0
      %474 = vst [vmem:[%s254] sm:$0xff] %v412
      %475 = vst [vmem:[%s254 + $0x8] sm:$0xff] %v415
      %476 = vst [vmem:[%s254 + $0x10] sm:$0xff] %v420
      %477 = vst [vmem:[%s254 + $0x18] sm:$0xff] %v423
      %478 = vst [vmem:[%s254 + $0x20] sm:$0xff] %v428
      %479 = vst [vmem:[%s254 + $0x28] sm:$0xff] %v431
      %480 = vst [vmem:[%s254 + $0x30] sm:$0xff] %v436
      %481 = vst [vmem:[%s254 + $0x38] sm:$0xff] %v439
      %482 = vst [vmem:[%s254 + $0x40] sm:$0xff] %v444
      %483 = vst [vmem:[%s254 + $0x48] sm:$0xff] %v447
      %484 = vst [vmem:[%s254 + $0x50] sm:$0xff] %v452
      %485 = vst [vmem:[%s254 + $0x58] sm:$0xff] %v455
      %486 = vst [vmem:[%s254 + $0x60] sm:$0xff] %v460
      %487 = vst [vmem:[%s254 + $0x68] sm:$0xff] %v463
      %488 = vst [vmem:[%s254 + $0x70] sm:$0xff] %v468
      %489 = vst [vmem:[%s254 + $0x78] sm:$0xff] %v471
      %s490 = smul.u32 16, %s21
      %p491 = scmp.lt.s32.totalorder %s19, 1
      %s492 = scalar_select %p491, %s19, 1
      %p493 = scmp.lt.s32.totalorder %s490, 15
      %s494 = scalar_select %p493, %s490, 15
      %p495 = scmp.lt.s32.totalorder %s20, 0
      %s496 = scalar_select %p495, %s20, 0
      %s497 = sadd.s32 %s496, %s494
      %s498 = smul.addr %s492, 16
      %s499 = sadd.s32 %s497, %s498
      %s500 = smul.addr %s499, 8
      %s501 = scalar_lea.vmem %s3, %s500
      // Predicated region
      $region33: #{downsample_forward.1} parent=31 // pred_check
        %p502 = pneg %p135
      $region34: #{downsample_forward.1} parent=31 // pred_check_branch
        %504 = sbr.rel (%p502) target = $region36
      $region35: #{downsample_forward.1} parent=31 // pred_region
        %s505 = smul.u32 16, %s21
      $region36: #{downsample_forward.1} parent=31 // pred_fallthru
        _
    $region32: #{downsample_forward.1} parent=5 // pred_fallthru
      _
    %p506 = scmp.le.s32.totalorder 2, %s9
    // Predicated region
    $region37: #{downsample_forward.1} parent=5 // pred_check
      %p507 = pneg %p506
    $region38: #{downsample_forward.1} parent=5 // pred_check_branch
      %509 = sbr.rel (%p507) target = $region40
    $region39: #{downsample_forward.1} parent=5 // pred_region
      %s510 = ssub.s32 %s9, 2
      // Predicated region
      $region41: #{downsample_forward.1} parent=39 // pred_check
        %p511 = pneg %p141
      $region42: #{downsample_forward.1} parent=39 // pred_check_branch
        %513 = sbr.rel (%p511) target = $region44
      $region43: #{downsample_forward.1} parent=39 // pred_region
        %s514 = smul.u32 16, %s24
        %p515 = scmp.lt.s32.totalorder %s22, 1
        %s516 = scalar_select %p515, %s22, 1
        %p517 = scmp.lt.s32.totalorder %s514, 15
        %s518 = scalar_select %p517, %s514, 15
        %p519 = scmp.lt.s32.totalorder %s23, 0
        %s520 = scalar_select %p519, %s23, 0
        %s521 = sadd.s32 %s520, %s518
        %s522 = smul.addr %s516, 16
        %s523 = sadd.s32 %s521, %s522
        %s524 = smul.addr %s523, 8
        %s525 = scalar_lea.vmem %s3, %s524
      $region44: #{downsample_forward.1} parent=39 // pred_fallthru
        _
    $region40: #{downsample_forward.1} parent=5 // pred_fallthru
      _
  $region6: #{downsample_forward.1} parent=0 // loop_footer
    %s13 = sadd.s32 1, %s9
  $region7: #{downsample_forward.1} parent=0 // loop_footer_branch
    %8 = sbr.rel target = $region3
  $region8: #{downsample_forward.1} parent=0 // loop_exit
    _

</llo_original>
